<compile_context>
chip_gen: v5e
topology: v5e:2x2
jax: 0.10.0
libtpu: 0.0.40
codegen_flags: <defaults>
</compile_context>

<pallas_src>
import functools
import math

import jax
import jax.numpy as jnp
from jax.experimental import pallas as pl
from jax.experimental.pallas import tpu as pltpu


def _lora_kernel(x_ref, wd_ref, wu_ref, o_ref, *, scale, compute_dtype):
    # x_ref : (tile_m, in_features)   VMEM, original activation dtype
    # wd_ref: (rank, in_features)     VMEM  (W_down, original layout)
    # wu_ref: (out_features, rank)    VMEM  (W_up, original layout)
    # o_ref : (tile_m, out_features)  VMEM, original activation dtype
    x = x_ref[...].astype(compute_dtype)
    wd = wd_ref[...].astype(compute_dtype)
    wu = wu_ref[...].astype(compute_dtype)

    # down = x @ W_down^T  (contract the in_features axes; "NT" matmul)
    down = jax.lax.dot_general(
        x, wd, dimension_numbers=(((1,), (1,)), ((), ())),
        preferred_element_type=jnp.float32)
    if scale != 1.0:
        down = down * scale          # scale the small rank-wide intermediate
    down = down.astype(compute_dtype)

    # up = down @ W_up^T   (contract the rank axes; "NT" matmul)
    up = jax.lax.dot_general(
        down, wu, dimension_numbers=(((1,), (1,)), ((), ())),
        preferred_element_type=jnp.float32)
    o_ref[...] = up.astype(o_ref.dtype)


def _round_up(x, mult):
    return ((x + mult - 1) // mult) * mult


def _choose_tile_m(m, row_bytes, act_budget_bytes):
    """Largest M tile (multiple of 8, <=512) whose double-buffered activation
    footprint fits the budget, keeping >=2 grid steps when M allows (v7x)."""
    cap = act_budget_bytes // (2 * row_bytes)
    cap = max(8, min(512, (cap // 8) * 8))
    if m <= 8:
        return m                              # single full-extent block
    if m <= 2 * cap:
        return min(cap, _round_up(pl.cdiv(m, 2), 8))
    return cap


def lora_linear_forward(hidden_states, w_down, w_up, network_alpha, rank,
                        *, compute_dtype=None, tile_m=None):
    """hidden_states: (..., in_features); w_down: (rank, in); w_up: (out, rank)."""
    orig_dtype = hidden_states.dtype
    if compute_dtype is None:
        compute_dtype = w_down.dtype          # matches the PyTorch module

    rank_d, in_features = w_down.shape
    out_features, rank_u = w_up.shape
    if rank_d != rank or rank_u != rank:
        raise ValueError("weight shapes inconsistent with rank")

    lead_shape = hidden_states.shape[:-1]
    m = int(math.prod(lead_shape)) if lead_shape else 1
    x2d = hidden_states.reshape(m, in_features)

    scale = 1.0
    if network_alpha is not None:
        scale = float(network_alpha) / float(rank)

    x_item = hidden_states.dtype.itemsize
    w_item = w_down.dtype.itemsize

    # VMEM budgeting: conservative enough for v7x (64 MiB physical VMEM).
    vmem_ceiling = 48 * 1024 * 1024
    w_bytes = 2 * (rank * in_features + out_features * rank) * w_item  # 2x buffers
    act_budget = max(4 * 1024 * 1024, vmem_ceiling - w_bytes - (4 << 20))
    row_bytes = (in_features + out_features) * x_item
    if tile_m is None:
        tile_m = _choose_tile_m(m, row_bytes, act_budget)

    grid_m = pl.cdiv(m, tile_m)
    act_bytes = 2 * tile_m * row_bytes
    vmem_limit = int(min(max(act_bytes + w_bytes + (4 << 20), 32 << 20), 56 << 20))

    kernel = functools.partial(_lora_kernel, scale=scale,
                               compute_dtype=compute_dtype)

    out2d = pl.pallas_call(
        kernel,
        out_shape=jax.ShapeDtypeStruct((m, out_features), orig_dtype),
        grid_spec=pltpu.PrefetchScalarGridSpec(
            num_scalar_prefetch=0,
            grid=(grid_m,),
            in_specs=[
                pl.BlockSpec((tile_m, in_features), lambda i: (i, 0)),
                pl.BlockSpec((rank, in_features), lambda i: (0, 0)),
                pl.BlockSpec((out_features, rank), lambda i: (0, 0)),
            ],
            out_specs=pl.BlockSpec((tile_m, out_features), lambda i: (i, 0)),
        ),
        compiler_params=pltpu.CompilerParams(
            dimension_semantics=("parallel",),
            vmem_limit_bytes=vmem_limit,
        ),
    )(x2d, w_down, w_up)

    return out2d.reshape(*lead_shape, out_features)


def init_lora_params(key, in_features, out_features, rank, dtype=jnp.float32):
    """Init matching the PyTorch module: down ~ N(0, 1/rank), up = 0."""
    if rank > min(in_features, out_features):
        raise ValueError(
            f"LoRA rank {rank} must be less or equal than "
            f"{min(in_features, out_features)}")
    k_down, _ = jax.random.split(key)
    w_down = (jax.random.normal(k_down, (rank, in_features), dtype=jnp.float32)
              * (1.0 / rank)).astype(dtype)
    w_up = jnp.zeros((out_features, rank), dtype=dtype)
    return w_down, w_up


def lora_reference(x, w_down, w_up, network_alpha, rank):
    """Plain-JAX reference mirroring the PyTorch forward (f32 accumulation)."""
    orig_dtype = x.dtype
    wdt = w_down.dtype
    hp = jax.lax.Precision.HIGHEST
    down = jnp.matmul(x.astype(wdt).astype(jnp.float32),
                      w_down.astype(jnp.float32).T, precision=hp)
    down = down.astype(wdt)
    up = jnp.matmul(down.astype(jnp.float32),
                    w_up.astype(jnp.float32).T, precision=hp)
    if network_alpha is not None:
        up = up * (network_alpha / rank)
    return up.astype(orig_dtype)


if __name__ == "__main__":
    batch, seq = 2, 9                 # M = 18 -> exercises the masked boundary block
    in_features, out_features, rank = 256, 128, 16   # lane-dense output (128)
    network_alpha = 84

    key = jax.random.PRNGKey(0)
    k_x, k_d, k_u = jax.random.split(key, 3)

    x = jax.random.normal(k_x, (batch, seq, in_features), dtype=jnp.float32)
    w_down = jax.random.normal(k_d, (rank, in_features), dtype=jnp.float32) / rank
    w_up = jax.random.normal(k_u, (out_features, rank), dtype=jnp.float32) * 0.1

    # f32 weights (compute dtype follows weight dtype, like the module).
    y = jax.block_until_ready(
        lora_linear_forward(x, w_down, w_up, network_alpha, rank))
    ref = lora_reference(x, w_down, w_up, network_alpha, rank)
    assert y.shape == (batch, seq, out_features)
    assert y.dtype == x.dtype
    assert jnp.allclose(y, ref, atol=1e-3, rtol=1e-3), \
        float(jnp.max(jnp.abs(y - ref)))

    # bf16 weights: the MXU/bandwidth-friendly path from the perf review
    # (intermediate rounded to bf16, matching PyTorch's weight-dtype behavior).
    wd_bf16 = w_down.astype(jnp.bfloat16)
    wu_bf16 = w_up.astype(jnp.bfloat16)
    y_bf16 = jax.block_until_ready(
        lora_linear_forward(x, wd_bf16, wu_bf16, network_alpha, rank))
    ref_bf16 = lora_reference(x, wd_bf16, wu_bf16, network_alpha, rank)
    assert y_bf16.dtype == x.dtype
    assert jnp.allclose(y_bf16, ref_bf16, atol=0.08, rtol=0.08), \
        float(jnp.max(jnp.abs(y_bf16 - ref_bf16)))

    # Module-faithful init (up = 0): output must be exactly zero.
    wd0, wu0 = init_lora_params(jax.random.PRNGKey(1), in_features,
                                out_features, rank, dtype=jnp.float32)
    y0 = jax.block_until_ready(
        lora_linear_forward(x, wd0, wu0, network_alpha, rank))
    assert jnp.allclose(y0, 0.0)

    print("KERNEL_OK")
</pallas_src>

<mosaic_0001>
module attributes {stable_mosaic.version = 11 : i64} {
  func.func @_lora_kernel(%arg0: i32, %arg1: memref<16x256xf32, #tpu.memory_space<vmem>>, %arg2: memref<16x256xf32, #tpu.memory_space<vmem>>, %arg3: memref<128x16xf32, #tpu.memory_space<vmem>>, %arg4: memref<16x128xf32, #tpu.memory_space<vmem>>) attributes {dimension_semantics = [#tpu.dimension_semantics<parallel>], iteration_bounds = array<i64: 2>, scalar_prefetch = 0 : i64, scratch_operands = 0 : i64, tpu.core_type = #tpu.core_type<tc>, window_params = [{transform_indices = @transform_0, window_bounds = array<i64: 16, 256>}, {pipeline_mode = #tpu.pipeline_mode<synchronous>, transform_indices = @transform_1, window_bounds = array<i64: 16, 256>}, {pipeline_mode = #tpu.pipeline_mode<synchronous>, transform_indices = @transform_2, window_bounds = array<i64: 128, 16>}, {transform_indices = @transform_3, window_bounds = array<i64: 16, 128>}]} {
    %c0 = arith.constant 0 : index
    %c0_0 = arith.constant 0 : index
    %0 = vector.load %arg1[%c0, %c0_0] : memref<16x256xf32, #tpu.memory_space<vmem>>, vector<16x256xf32>
    %c0_1 = arith.constant 0 : index
    %c0_2 = arith.constant 0 : index
    %1 = vector.load %arg2[%c0_1, %c0_2] : memref<16x256xf32, #tpu.memory_space<vmem>>, vector<16x256xf32>
    %c0_3 = arith.constant 0 : index
    %c0_4 = arith.constant 0 : index
    %2 = vector.load %arg3[%c0_3, %c0_4] : memref<128x16xf32, #tpu.memory_space<vmem>>, vector<128x16xf32>
    %cst = arith.constant dense<0.000000e+00> : vector<16x16xf32>
    %3 = tpu.matmul %0, %1, %cst {dimension_numbers = #tpu.dot_dimension_numbers<[1], [1], [0], [0], [0, 0, 1, 0], [], []>} : vector<16x256xf32>, vector<16x256xf32>, vector<16x16xf32> -> vector<16x16xf32>
    %cst_5 = arith.constant 5.250000e+00 : f32
    %4 = vector.broadcast %cst_5 : f32 to vector<16x16xf32>
    %5 = arith.mulf %3, %4 : vector<16x16xf32>
    %cst_6 = arith.constant dense<0.000000e+00> : vector<16x128xf32>
    %6 = tpu.matmul %5, %2, %cst_6 {dimension_numbers = #tpu.dot_dimension_numbers<[1], [1], [0], [0], [0, 0, 1, 0], [], []>} : vector<16x16xf32>, vector<128x16xf32>, vector<16x128xf32> -> vector<16x128xf32>
    %c0_7 = arith.constant 0 : index
    %c0_8 = arith.constant 0 : index
    %7 = vector.load %arg4[%c0_7, %c0_8] : memref<16x128xf32, #tpu.memory_space<vmem>>, vector<16x128xf32>
    tpu.vector_store %arg4[%c0_7, %c0_8], %6 {strides = array<i32>} : memref<16x128xf32, #tpu.memory_space<vmem>>, vector<16x128xf32>,
    return
  }
  func.func @transform_0(%arg0: i32) -> (i32, i32) {
    %c0_i32 = arith.constant 0 : i32
    %c0_i32_0 = arith.constant 0 : i32
    return %arg0, %c0_i32 : i32, i32
  }
  func.func @transform_1(%arg0: i32) -> (i32, i32) {
    %c0_i32 = arith.constant 0 : i32
    %c0_i32_0 = arith.constant 0 : i32
    %c0_i32_1 = arith.constant 0 : i32
    return %c0_i32, %c0_i32_0 : i32, i32
  }
  func.func @transform_2(%arg0: i32) -> (i32, i32) {
    %c0_i32 = arith.constant 0 : i32
    %c0_i32_0 = arith.constant 0 : i32
    %c0_i32_1 = arith.constant 0 : i32
    return %c0_i32, %c0_i32_0 : i32, i32
  }
  func.func @transform_3(%arg0: i32) -> (i32, i32) {
    %c0_i32 = arith.constant 0 : i32
    %c0_i32_0 = arith.constant 0 : i32
    return %arg0, %c0_i32 : i32, i32
  }
}

</mosaic_0001>

<llo_original>
// kernel: tpu_custom_call.1
$region0: #{tpu_custom_call.1}
  #allocation0 [shape = 'u32[]', space=smem, size = 0x4, offset = 0x4, fixed_abs, tag = 'smem constant byte address 0x4 - core index']
  #allocation1 [shape = 'u32[72,128]{1,0:T(1,128)}', space=vmem, size = 0x9000, scoped, tag = 'internal scratch']
  %s0 = inlined_call_operand.vmem [shape: f32[18,256], index: 0, kind: input, shape index: {}]
  %s1 = inlined_call_operand.vmem [shape: f32[16,256], index: 1, kind: input, shape index: {}]
  %s2 = inlined_call_operand.vmem [shape: f32[128,16], index: 2, kind: input, shape index: {}]
  %s3 = inlined_call_operand.hbm [shape: f32[18,128], index: 3, kind: output, shape index: {}]
  %s4 = sld [smem:[#allocation0]]
  $region45: #{tpu_custom_call.1} parent=0
    _
  %s6 = ssub.s32 1, %s4
  %s7 = scalar_select 0, %s6, %s4
  $region1: #{tpu_custom_call.1} parent=0
    #allocation2 [shape = 'u8[16384]{0}', space=vmem, size = 0x4000, scoped, tag = 'output window, operand 0']
    #allocation3 [shape = 's32[2]{0}', space=sflag, size = 0x8, scoped, tag = 'scoped memory for tpu_custom_call.1']
    %8 = vsyncpa [#allocation3], 0
    %s9 = scalar_lea.sflag [#allocation3], 1
    %10 = vsyncpa %s9, 0
    loop: start=0, step=1, limit=4
    $region2: #{tpu_custom_call.1} parent=1 // loop_pre_header
      _
    $region3: #{tpu_custom_call.1} parent=1 // loop_header
      %s12 = sphi 0, %s16
      %p13 = scmp.ge.s32.totalorder %s12, 4
      %s22 = sphi 0, %s24
      %s25 = sphi 0, %s22
      %s26 = sphi 0, %s25
      %s42 = sphi 0, %s26
      %s46 = sphi 0, %s46
      %s48 = sphi 0, %s46
      %s49 = sphi 0, %s48
      %s63 = sphi 0, %s49
      %s67 = sphi 0, %s67
      %s69 = sphi 0, %s67
      %s70 = sphi 0, %s69
      %s84 = sphi 0, %s70
      %s90 = sphi 0, %s92
      %s93 = sphi 0, %s90
      %s94 = sphi 0, %s93
      %s110 = sphi 0, %s94
    $region4: #{tpu_custom_call.1} parent=1 // loop_header_branch
      %15 = sbr.rel (%p13) target = $region8
    $region5: #{tpu_custom_call.1} parent=1 // loop_body
      %s17 = ssub.s32 %s12, 1
      %s18 = ssub.s32 %s12, 2
      %s19 = sadd.s32 %s12, 1
      %s20 = ssub.s32 %s12, %s19
      %p21 = scmp.eq.s32.totalorder %s20, 0
      %s23 = sadd.s32 %s22, 1
      %s24 = scalar_select %p21, %s22, %s23
      %p27 = pneg %p21
      %p28 = scmp.eq.s32.totalorder %s12, 1
      %p29 = por %p27, %p28
      %p30 = scmp.ne.s32.totalorder %s22, %s25
      %p31 = scmp.eq.s32.totalorder %s12, 0
      %p32 = por %p30, %p31
      %p33 = scmp.ne.s32.totalorder %s22, %s25
      %p34 = scmp.eq.s32.totalorder %s17, 1
      %p35 = por %p33, %p34
      %p36 = scmp.ne.s32.totalorder %s25, %s26
      %p37 = scmp.eq.s32.totalorder %s17, 0
      %p38 = por %p36, %p37
      %p39 = scmp.ne.s32.totalorder %s25, %s26
      %p40 = scmp.eq.s32.totalorder %s18, 1
      %p41 = por %p39, %p40
      %p43 = scmp.ne.s32.totalorder %s26, %s42
      %p44 = scmp.eq.s32.totalorder %s18, 0
      %p45 = por %p43, %p44
      %s47 = sadd.s32 %s46, 1
      %p50 = scmp.eq.s32.totalorder %s12, 1
      %p51 = scmp.ne.s32.totalorder %s46, %s48
      %p52 = scmp.eq.s32.totalorder %s12, 0
      %p53 = por %p51, %p52
      %p54 = scmp.ne.s32.totalorder %s46, %s48
      %p55 = scmp.eq.s32.totalorder %s17, 1
      %p56 = por %p54, %p55
      %p57 = scmp.ne.s32.totalorder %s48, %s49
      %p58 = scmp.eq.s32.totalorder %s17, 0
      %p59 = por %p57, %p58
      %p60 = scmp.ne.s32.totalorder %s48, %s49
      %p61 = scmp.eq.s32.totalorder %s18, 1
      %p62 = por %p60, %p61
      %p64 = scmp.ne.s32.totalorder %s49, %s63
      %p65 = scmp.eq.s32.totalorder %s18, 0
      %p66 = por %p64, %p65
      %s68 = sadd.s32 %s67, 1
      %p71 = scmp.eq.s32.totalorder %s12, 1
      %p72 = scmp.ne.s32.totalorder %s67, %s69
      %p73 = scmp.eq.s32.totalorder %s12, 0
      %p74 = por %p72, %p73
      %p75 = scmp.ne.s32.totalorder %s67, %s69
      %p76 = scmp.eq.s32.totalorder %s17, 1
      %p77 = por %p75, %p76
      %p78 = scmp.ne.s32.totalorder %s69, %s70
      %p79 = scmp.eq.s32.totalorder %s17, 0
      %p80 = por %p78, %p79
      %p81 = scmp.ne.s32.totalorder %s69, %s70
      %p82 = scmp.eq.s32.totalorder %s18, 1
      %p83 = por %p81, %p82
      %p85 = scmp.ne.s32.totalorder %s70, %s84
      %p86 = scmp.eq.s32.totalorder %s18, 0
      %p87 = por %p85, %p86
      %s88 = ssub.s32 %s12, %s19
      %p89 = scmp.eq.s32.totalorder %s88, 0
      %s91 = sadd.s32 %s90, 1
      %s92 = scalar_select %p89, %s90, %s91
      %p95 = pneg %p89
      %p96 = scmp.eq.s32.totalorder %s12, 1
      %p97 = por %p95, %p96
      %p98 = scmp.ne.s32.totalorder %s90, %s93
      %p99 = scmp.eq.s32.totalorder %s12, 0
      %p100 = por %p98, %p99
      %p101 = scmp.ne.s32.totalorder %s90, %s93
      %p102 = scmp.eq.s32.totalorder %s17, 1
      %p103 = por %p101, %p102
      %p104 = scmp.ne.s32.totalorder %s93, %s94
      %p105 = scmp.eq.s32.totalorder %s17, 0
      %p106 = por %p104, %p105
      %p107 = scmp.ne.s32.totalorder %s93, %s94
      %p108 = scmp.eq.s32.totalorder %s18, 1
      %p109 = por %p107, %p108
      %p111 = scmp.ne.s32.totalorder %s94, %s110
      %p112 = scmp.eq.s32.totalorder %s18, 0
      %p113 = por %p111, %p112
      %p114 = scmp.le.s32.totalorder 1, %s12
      %p115 = scmp.lt.s32.totalorder %s12, 3
      %p116 = pnand %p114, %p115
      %p117 = pneg %p116
      // Predicated region
      $region9: #{tpu_custom_call.1} parent=5 // pred_check
        _
      $region10: #{tpu_custom_call.1} parent=5 // pred_check_branch
        %119 = sbr.rel (%p116) target = $region12
      $region11: #{tpu_custom_call.1} parent=5 // pred_region
        %s120 = ssub.s32 %s12, 1
        // Predicated region
        $region13: #{tpu_custom_call.1} parent=11 // pred_check
          %p121 = pneg %p59
        $region14: #{tpu_custom_call.1} parent=11 // pred_check_branch
          %123 = sbr.rel (%p121) target = $region16
        $region15: #{tpu_custom_call.1} parent=11 // pred_region
          _
        $region16: #{tpu_custom_call.1} parent=11 // pred_fallthru
          _
        // Predicated region
        $region17: #{tpu_custom_call.1} parent=11 // pred_check
          %p124 = pneg %p80
        $region18: #{tpu_custom_call.1} parent=11 // pred_check_branch
          %126 = sbr.rel (%p124) target = $region20
        $region19: #{tpu_custom_call.1} parent=11 // pred_region
          _
        $region20: #{tpu_custom_call.1} parent=11 // pred_fallthru
          _
      $region12: #{tpu_custom_call.1} parent=5 // pred_fallthru
        _
      %p127 = scmp.lt.s32.totalorder %s12, 2
      // Predicated region
      $region21: #{tpu_custom_call.1} parent=5 // pred_check
        %p128 = pneg %p127
      $region22: #{tpu_custom_call.1} parent=5 // pred_check_branch
        %130 = sbr.rel (%p128) target = $region24
      $region23: #{tpu_custom_call.1} parent=5 // pred_region
        // Predicated region
        $region25: #{tpu_custom_call.1} parent=23 // pred_check
          %p131 = pneg %p32
        $region26: #{tpu_custom_call.1} parent=23 // pred_check_branch
          %133 = sbr.rel (%p131) target = $region28
        $region27: #{tpu_custom_call.1} parent=23 // pred_region
          %s134 = smul.u32 2, %s12
          %s135 = ssub.s32 3, %s134
          %p136 = scmp.lt.s32.totalorder %s135, 2
          %s137 = scalar_select %p136, %s135, 2
          %s138 = smul.u32 8, %s137
          %s139 = smul.u32 %s138, 2
          %p140 = scmp.lt.s32.totalorder %s134, 2
          %s141 = scalar_select %p140, %s134, 2
          %s142 = smul.addr %s141, 2
          %s143 = smul.addr %s142, 8
          %s144 = scalar_lea.vmem %s0, %s143
          %s145 = smul.u32 2, %s12
          %s146 = ssub.s32 3, %s145
          %p147 = scmp.lt.s32.totalorder %s146, 2
          %s148 = scalar_select %p147, %s146, 2
          %s149 = smul.u32 8, %s148
          %s150 = smul.u32 %s149, 2
        $region28: #{tpu_custom_call.1} parent=23 // pred_fallthru
          _
      $region24: #{tpu_custom_call.1} parent=5 // pred_fallthru
        _
      %p151 = scmp.le.s32.totalorder 1, %s12
      %p152 = scmp.lt.s32.totalorder %s12, 3
      %p153 = pnand %p151, %p152
      %p154 = pneg %p153
      // Predicated region
      $region29: #{tpu_custom_call.1} parent=5 // pred_check
        _
      $region30: #{tpu_custom_call.1} parent=5 // pred_check_branch
        %156 = sbr.rel (%p153) target = $region32
      $region31: #{tpu_custom_call.1} parent=5 // pred_region
        %s157 = ssub.s32 %s12, 1
        %s158 = smul.u32 2, %s17
        %s159 = ssub.s32 3, %s158
        %p160 = scmp.lt.s32.totalorder %s159, 2
        %s161 = scalar_select %p160, %s159, 2
        %s162 = smul.u32 8, %s161
        %s163 = smul.u32 %s162, 2
        %p164 = scmp.lt.s32.totalorder %s158, 2
        %s165 = scalar_select %p164, %s158, 2
        %s166 = smul.addr %s165, 2
        %s167 = smul.addr %s166, 8
        %s168 = scalar_lea.vmem %s0, %s167
        %p169 = pneg %p38
        %p170 = pneg %p35
        %p171 = pneg %p59
        %p172 = pneg %p56
        %p173 = pneg %p80
        %p174 = pneg %p77
        %p175 = pneg %p106
        %p176 = pneg %p103
        %s177 = sand.u32 %s93, 1
        %s178 = scalar_lea.sflag [#allocation3], %s177
        %s179 = sand.u32 %s93, 1
        %s180 = smul.addr %s179, 16
        %s181 = scalar_lea.vmem [#allocation2], %s180
        %s182 = smul.u32 2, %s17
        %s183 = ssub.s32 3, %s182
        %p184 = scmp.lt.s32.totalorder %s183, 2
        %s185 = scalar_select %p184, %s183, 2
        %s186 = smul.u32 8, %s185
        %s187 = smul.u32 %s186, 2
        %p188 = scmp.lt.s32.totalorder %s182, 2
        %s189 = scalar_select %p188, %s182, 2
        %s190 = smul.addr %s189, 2
        %s191 = smul.addr %s190, 8
        %s192 = scalar_lea.vmem %s0, %s191
        %s193 = smul.u32 2, %s17
        %s194 = ssub.s32 3, %s193
        %p195 = scmp.lt.s32.totalorder %s194, 2
        %s196 = scalar_select %p195, %s194, 2
        %s197 = smul.u32 8, %s196
        %s198 = smul.u32 %s197, 2
        %s199 = smul.u32 2, %s17
        %s200 = ssub.s32 3, %s199
        %p201 = scmp.lt.s32.totalorder %s200, 2
        %s202 = scalar_select %p201, %s200, 2
        %s203 = smul.u32 8, %s202
        %v204 = vld [vmem:[%s192] sm:$0xff]
        %v205 = vld [vmem:[%s192 + $0x8] sm:$0xff]
        %v206 = vld [vmem:[%s192 + $0x10] sm:$0xff]
        %v207 = vld [vmem:[%s192 + $0x18] sm:$0xff]
        %v208 = vld [vmem:[%s1] sm:$0xff]
        %v209 = vld [vmem:[%s1 + $0x8] sm:$0xff]
        %v210 = vld [vmem:[%s1 + $0x10] sm:$0xff]
        %v211 = vld [vmem:[%s1 + $0x18] sm:$0xff]
        %v212 = vld [vmem:[%s2] sm:$0xff]
        %v213 = vld [vmem:[%s2 + $0x8] sm:$0xff]
        %v214 = vld [vmem:[%s2 + $0x10] sm:$0xff]
        %v215 = vld [vmem:[%s2 + $0x18] sm:$0xff]
        %v216 = vld [vmem:[%s2 + $0x20] sm:$0xff]
        %v217 = vld [vmem:[%s2 + $0x28] sm:$0xff]
        %v218 = vld [vmem:[%s2 + $0x30] sm:$0xff]
        %v219 = vld [vmem:[%s2 + $0x38] sm:$0xff]
        %v220 = vld [vmem:[%s2 + $0x40] sm:$0xff]
        %v221 = vld [vmem:[%s2 + $0x48] sm:$0xff]
        %v222 = vld [vmem:[%s2 + $0x50] sm:$0xff]
        %v223 = vld [vmem:[%s2 + $0x58] sm:$0xff]
        %v224 = vld [vmem:[%s2 + $0x60] sm:$0xff]
        %v225 = vld [vmem:[%s2 + $0x68] sm:$0xff]
        %v226 = vld [vmem:[%s2 + $0x70] sm:$0xff]
        %v227 = vld [vmem:[%s2 + $0x78] sm:$0xff]
        %228 = vmatpush.xpose.msra.mxu0 0.0
        %229 = vmatpush.xpose.msra.mxu0 0.0
        %230 = vmatpush.xpose.msra.mxu0 0.0
        %231 = vmatpush.xpose.msra.mxu0 0.0
        %232 = vmatpush.xpose.msra.mxu0 0.0
        %233 = vmatpush.xpose.msra.mxu0 0.0
        %234 = vmatpush.xpose.msra.mxu0 0.0
        %235 = vmatpush.xpose.msra.mxu0 0.0
        %236 = vmatpush.xpose.msra.mxu0 0.0
        %237 = vmatpush.xpose.msra.mxu0 0.0
        %238 = vmatpush.xpose.msra.mxu0 0.0
        %239 = vmatpush.xpose.msra.mxu0 0.0
        %240 = vmatpush.xpose.msra.mxu0 0.0
        %241 = vmatpush.xpose.msra.mxu0 0.0
        %242 = vmatpush.xpose.msra.mxu0 %v210
        %243 = vmatpush.xpose.msra.mxu0 %v208
        %244 = vmatmul.f32.gmra.mxu0 %v204
        %v245 = vpop.f32.mrf.mxu0
        %v246 = vadd.f32 0.0, %v245
        %247 = vmatmul.f32.gmra.mxu0 %v206
        %v248 = vpop.f32.mrf.mxu0
        %v249 = vadd.f32 0.0, %v248
        %250 = vdwg.mxu0
        %251 = vmatpush.xpose.msra.mxu0 0.0
        %252 = vmatpush.xpose.msra.mxu0 0.0
        %253 = vmatpush.xpose.msra.mxu0 0.0
        %254 = vmatpush.xpose.msra.mxu0 0.0
        %255 = vmatpush.xpose.msra.mxu0 0.0
        %256 = vmatpush.xpose.msra.mxu0 0.0
        %257 = vmatpush.xpose.msra.mxu0 0.0
        %258 = vmatpush.xpose.msra.mxu0 0.0
        %259 = vmatpush.xpose.msra.mxu0 0.0
        %260 = vmatpush.xpose.msra.mxu0 0.0
        %261 = vmatpush.xpose.msra.mxu0 0.0
        %262 = vmatpush.xpose.msra.mxu0 0.0
        %263 = vmatpush.xpose.msra.mxu0 0.0
        %264 = vmatpush.xpose.msra.mxu0 0.0
        %265 = vmatpush.xpose.msra.mxu0 %v211
        %266 = vmatpush.xpose.msra.mxu0 %v209
        %267 = vmatmul.f32.gmra.mxu0 %v205
        %v268 = vpop.f32.mrf.mxu0
        %v269 = vadd.f32 %v246, %v268
        %270 = vmatmul.f32.gmra.mxu0 %v207
        %v271 = vpop.f32.mrf.mxu0
        %v272 = vadd.f32 %v249, %v271
        %273 = vdwg.mxu0
        %v274 = vmul.f32 %v269, 5.25
        %v275 = vmul.f32 %v272, 5.25
        %vm276 = vcmask 130048
        %v278 = vsel %vm276, %v274, 0
        %v281 = vsel %vm276, %v275, 0
        %v284 = vsel %vm276, %v212, 0
        %v287 = vsel %vm276, %v213, 0
        %v290 = vsel %vm276, %v214, 0
        %v293 = vsel %vm276, %v215, 0
        %v296 = vsel %vm276, %v216, 0
        %v299 = vsel %vm276, %v217, 0
        %v302 = vsel %vm276, %v218, 0
        %v305 = vsel %vm276, %v219, 0
        %v308 = vsel %vm276, %v220, 0
        %v311 = vsel %vm276, %v221, 0
        %v314 = vsel %vm276, %v222, 0
        %v317 = vsel %vm276, %v223, 0
        %v320 = vsel %vm276, %v224, 0
        %v323 = vsel %vm276, %v225, 0
        %v326 = vsel %vm276, %v226, 0
        %v329 = vsel %vm276, %v227, 0
        %331 = vmatpush.xpose.msra.mxu0 %v329
        %332 = vmatpush.xpose.msra.mxu0 %v326
        %333 = vmatpush.xpose.msra.mxu0 %v323
        %334 = vmatpush.xpose.msra.mxu0 %v320
        %335 = vmatpush.xpose.msra.mxu0 %v317
        %336 = vmatpush.xpose.msra.mxu0 %v314
        %337 = vmatpush.xpose.msra.mxu0 %v311
        %338 = vmatpush.xpose.msra.mxu0 %v308
        %339 = vmatpush.xpose.msra.mxu0 %v305
        %340 = vmatpush.xpose.msra.mxu0 %v302
        %341 = vmatpush.xpose.msra.mxu0 %v299
        %342 = vmatpush.xpose.msra.mxu0 %v296
        %343 = vmatpush.xpose.msra.mxu0 %v293
        %344 = vmatpush.xpose.msra.mxu0 %v290
        %345 = vmatpush.xpose.msra.mxu0 %v287
        %346 = vmatpush.xpose.msra.mxu0 %v284
        %347 = vmatmul.f32.gmra.mxu0 %v278
        %v348 = vpop.f32.mrf.mxu0
        %v349 = vadd.f32 0.0, %v348
        %350 = vmatmul.f32.gmra.mxu0 %v281
        %v351 = vpop.f32.mrf.mxu0
        %v352 = vadd.f32 0.0, %v351
        %353 = vdwg.mxu0
        %354 = vst [vmem:[%s181] sm:$0xff] %v349
        %355 = vst [vmem:[%s181 + $0x8] sm:$0xff] %v352
        %s356 = sand.u32 %s93, 1
        %s357 = scalar_lea.sflag [#allocation3], %s356
        %s358 = sand.u32 %s93, 1
        %s359 = smul.addr %s358, 16
        %s360 = scalar_lea.vmem [#allocation2], %s359
        // Predicated region
        $region33: #{tpu_custom_call.1} parent=31 // pred_check
          %p361 = pneg %p103
        $region34: #{tpu_custom_call.1} parent=31 // pred_check_branch
          %363 = sbr.rel (%p361) target = $region36
        $region35: #{tpu_custom_call.1} parent=31 // pred_region
          %s364 = smul.u32 2, %s17
          %s365 = ssub.s32 3, %s364
          %p366 = scmp.lt.s32.totalorder %s365, 2
          %s367 = scalar_select %p366, %s365, 2
          %s368 = smul.u32 8, %s367
          %s369 = ssub.s32 16, %s368
          %s370 = sshll.u32 %s369, 4
          %371 = vsyncadd %s357, %s370
          %p372 = scmp.ne.s32.totalorder 0, %s368
          %s373 = smul.addr %s364, 8
          %s374 = scalar_lea.hbm %s3, %s373
          %s375 = smul.u32 8, %s367
          %s376 = sshll.u32 %s360, 4
          %s377 = int_to_ptr.vmem [resolvable:$true] %s376
          %s378 = sshll.u32 %s374, 4
          %s379 = int_to_ptr.hbm [resolvable:$true] %s378
          %s380 = sshll.u32 %s375, 4
          %384 = dma.vmem_to_hbm [thread:$0]  (%p372), %s377, %s380, %s379, %s357, 128, 128, 8
        $region36: #{tpu_custom_call.1} parent=31 // pred_fallthru
          _
      $region32: #{tpu_custom_call.1} parent=5 // pred_fallthru
        _
      %p385 = scmp.le.s32.totalorder 2, %s12
      // Predicated region
      $region37: #{tpu_custom_call.1} parent=5 // pred_check
        %p386 = pneg %p385
      $region38: #{tpu_custom_call.1} parent=5 // pred_check_branch
        %388 = sbr.rel (%p386) target = $region40
      $region39: #{tpu_custom_call.1} parent=5 // pred_region
        %s389 = ssub.s32 %s12, 2
        // Predicated region
        $region41: #{tpu_custom_call.1} parent=39 // pred_check
          %p390 = pneg %p109
        $region42: #{tpu_custom_call.1} parent=39 // pred_check_branch
          %392 = sbr.rel (%p390) target = $region44
        $region43: #{tpu_custom_call.1} parent=39 // pred_region
          %s393 = sand.u32 %s94, 1
          %s394 = scalar_lea.sflag [#allocation3], %s393
          %s395 = sand.u32 %s94, 1
          %s396 = smul.addr %s395, 16
          %s397 = scalar_lea.vmem [#allocation2], %s396
          %399 = dma.done %s394, 256
        $region44: #{tpu_custom_call.1} parent=39 // pred_fallthru
          _
      $region40: #{tpu_custom_call.1} parent=5 // pred_fallthru
        _
    $region6: #{tpu_custom_call.1} parent=1 // loop_footer
      %s16 = sadd.s32 1, %s12
    $region7: #{tpu_custom_call.1} parent=1 // loop_footer_branch
      %11 = sbr.rel target = $region3
    $region8: #{tpu_custom_call.1} parent=1 // loop_exit
      _
    %400 = vsyncpa [#allocation3], 1
    %s401 = scalar_lea.sflag [#allocation3], 1
    %402 = vsyncpa %s401, 1

</llo_original>
